<compile_context>
chip_gen: v7x
topology: tpu7x:2x2x1
jax: 0.10.0
libtpu: 0.0.40
codegen_flags: <defaults>
</compile_context>

<pallas_src>
import jax
import jax.numpy as jnp
from jax.experimental import pallas as pl
from jax.experimental.pallas import tpu as pltpu

STATE_DIM = 3      # Pendulum-v1 observation_space.shape[0]
ACTION_DIM = 1     # Pendulum-v1 action_space.shape[0]
HIDDEN = 64
STATE_PAD = 8      # pad 3 -> 8 (3 state dims + 1.0 bias row + 4 zero rows)
LANE = 128         # batch tile must be a multiple of the lane width
DEFAULT_TB = 4096  # max batch (lane) tile per grid step


def _round_up(v, m):
    return ((v + m - 1) // m) * m


def _default_matmul_dtype():
    """bf16 MXU operands on v6e/v7x; f32 elsewhere (v5e has no bf16 VPU)."""
    try:
        kind = jax.devices()[0].device_kind.lower()
    except Exception:
        return jnp.float32
    if "v6" in kind or "v7" in kind:
        return jnp.bfloat16
    return jnp.float32


# --------------------------------------------------------------------------- #
# Kernel
# --------------------------------------------------------------------------- #
def policy_kernel(xT_ref, w1T_ref, w2T_ref, b2_ref, w3T_ref, b3_ref, oT_ref):
    # xT_ref:  (STATE_PAD, TB)   batch on lanes; row STATE_DIM holds 1.0 (bias row)
    # w1T_ref: (HIDDEN, STATE_PAD)  column STATE_DIM holds b1 (bias folded in)
    # w2T_ref: (HIDDEN, HIDDEN)     b2_ref: (HIDDEN, 1) f32
    # w3T_ref: (ACTION_DIM, HIDDEN) b3_ref: (ACTION_DIM, 1) f32
    mm_dtype = w2T_ref.dtype

    # fc1 (+ folded b1 via the ones row) + ReLU : (64, 8) @ (8, TB) -> (64, TB)
    h1 = jnp.dot(w1T_ref[...], xT_ref[...], preferred_element_type=jnp.float32)
    h1 = jnp.maximum(h1, 0.0).astype(mm_dtype)

    # fc2 + b2 + ReLU : (64, 64) @ (64, TB) -> (64, TB)   (lane-dense vregs)
    h2 = jnp.dot(w2T_ref[...], h1, preferred_element_type=jnp.float32) + b2_ref[...]
    h2 = jnp.maximum(h2, 0.0).astype(mm_dtype)

    # fc3 + b3 + tanh : (1, 64) @ (64, TB) -> (1, TB)     (lane-dense output)
    h3 = jnp.dot(w3T_ref[...], h2, preferred_element_type=jnp.float32) + b3_ref[...]
    oT_ref[...] = jnp.tanh(h3).astype(oT_ref.dtype)


# --------------------------------------------------------------------------- #
# One-time parameter preparation (hoisted out of the per-call path)
# --------------------------------------------------------------------------- #
def prepare_params(params, matmul_dtype=None):
    """params: (w1(3,64), b1(1,64), w2(64,64), b2(1,64), w3(64,1), b3(1,1))."""
    if matmul_dtype is None:
        matmul_dtype = _default_matmul_dtype()
    w1, b1, w2, b2, w3, b3 = params

    w1T = jnp.zeros((HIDDEN, STATE_PAD), jnp.float32)
    w1T = w1T.at[:, :STATE_DIM].set(w1.T)
    w1T = w1T.at[:, STATE_DIM].set(b1.reshape(HIDDEN))      # fold b1 into matmul
    w1T = w1T.astype(matmul_dtype)

    w2T = w2.T.astype(matmul_dtype)                          # (HIDDEN, HIDDEN)
    b2c = b2.reshape(HIDDEN, 1).astype(jnp.float32)
    w3T = w3.T.astype(matmul_dtype)                          # (ACTION_DIM, HIDDEN)
    b3c = b3.reshape(ACTION_DIM, 1).astype(jnp.float32)
    return w1T, w2T, b2c, w3T, b3c


def _choose_tile(B, tb):
    tb = max(LANE, _round_up(int(tb), LANE))   # user tb rounded to a lane multiple
    n_steps = pl.cdiv(B, tb)                   # steps needed at tile limit tb
    if n_steps == 1 and B >= 2 * LANE:         # force >= 2 steps so v7x's 2nd TC has work
        n_steps = 2
    TB = _round_up(pl.cdiv(B, n_steps), LANE)  # best-fit tile (last tile not mostly pad)
    Bp = _round_up(B, TB)
    return TB, Bp


# --------------------------------------------------------------------------- #
# Forward wrapper
# --------------------------------------------------------------------------- #
def _policy_forward_impl(x, prepared, tb=DEFAULT_TB):
    """x: (B, STATE_DIM) f32 -> (B, ACTION_DIM) f32 (matches PyTorch forward)."""
    w1T, w2T, b2c, w3T, b3c = prepared
    B = x.shape[0]
    if B == 0:
        return jnp.zeros((0, ACTION_DIM), jnp.float32)

    mm_dtype = w2T.dtype
    mm_bytes = jnp.dtype(mm_dtype).itemsize
    TB, Bp = _choose_tile(B, tb)

    # Batch-on-lanes input: (STATE_PAD, Bp); row STATE_DIM = 1.0 so fc1's matmul
    # adds b1 (pad rows / pad columns stay zero). Runs under the same jit as the
    # kernel call, so it fuses with the producer rather than a per-call round trip.
    xT = jnp.zeros((STATE_PAD, Bp), mm_dtype)
    xT = xT.at[:STATE_DIM, :B].set(x.T.astype(mm_dtype))
    xT = xT.at[STATE_DIM, :B].set(jnp.asarray(1.0, mm_dtype))

    # Rough VMEM footprint (double-buffered x/out tiles + h1/h2/h3 temporaries);
    # only raise the scoped-VMEM limit when large TB actually needs it (v5e: 16 MiB).
    est_vmem = TB * (2 * STATE_PAD * mm_bytes + 2 * ACTION_DIM * 4 + 3 * HIDDEN * 4) + 64 * 1024
    cp = {"dimension_semantics": ("parallel",)}   # v7x: shard batch grid over 2 TCs
    if est_vmem > 12 * 2**20:
        cp["vmem_limit_bytes"] = min(int(est_vmem * 1.5), 64 * 2**20)

    grid = (Bp // TB,)
    oT = pl.pallas_call(
        policy_kernel,
        out_shape=jax.ShapeDtypeStruct((ACTION_DIM, Bp), jnp.float32),
        grid=grid,
        in_specs=[
            pl.BlockSpec((STATE_PAD, TB), lambda i: (0, i)),      # x tile streams
            pl.BlockSpec((HIDDEN, STATE_PAD), lambda i: (0, 0)),  # weights VMEM-resident
            pl.BlockSpec((HIDDEN, HIDDEN), lambda i: (0, 0)),
            pl.BlockSpec((HIDDEN, 1), lambda i: (0, 0)),
            pl.BlockSpec((ACTION_DIM, HIDDEN), lambda i: (0, 0)),
            pl.BlockSpec((ACTION_DIM, 1), lambda i: (0, 0)),
        ],
        out_specs=pl.BlockSpec((ACTION_DIM, TB), lambda i: (0, i)),
        compiler_params=pltpu.CompilerParams(**cp),
    )(xT, w1T, w2T, b2c, w3T, b3c)

    return oT[:, :B].T                                            # back to (B, ACTION_DIM)


policy_forward = jax.jit(_policy_forward_impl, static_argnames=("tb",))


# --------------------------------------------------------------------------- #
# Init + pure-JAX reference
# --------------------------------------------------------------------------- #
def init_params(key):
    """Deterministic init matching nn.Linear shapes (weights stored (in, out))."""
    k1, k2, k3, k4, k5, k6 = jax.random.split(key, 6)

    def uniform(k, shape, fan_in):
        bound = 1.0 / jnp.sqrt(fan_in)
        return jax.random.uniform(k, shape, jnp.float32, -bound, bound)

    w1 = uniform(k1, (STATE_DIM, HIDDEN), STATE_DIM)
    b1 = uniform(k2, (1, HIDDEN), STATE_DIM)
    w2 = uniform(k3, (HIDDEN, HIDDEN), HIDDEN)
    b2 = uniform(k4, (1, HIDDEN), HIDDEN)
    w3 = uniform(k5, (HIDDEN, ACTION_DIM), HIDDEN)
    b3 = uniform(k6, (1, ACTION_DIM), HIDDEN)
    return w1, b1, w2, b2, w3, b3


def reference_forward(x, params):
    w1, b1, w2, b2, w3, b3 = params
    h = jax.nn.relu(x @ w1 + b1)
    h = jax.nn.relu(h @ w2 + b2)
    return jnp.tanh(h @ w3 + b3)


if __name__ == "__main__":
    key = jax.random.PRNGKey(0)
    kx, kp = jax.random.split(key)
    params = init_params(kp)

    # B = 300: not a multiple of 128, and >= 256 so the >=2-grid-step (dual-TC)
    # path and the best-fit TB selection (TB=256, Bp=512) are both exercised.
    B = 300
    x = jax.random.normal(kx, (B, STATE_DIM), dtype=jnp.float32)
    ref = reference_forward(x, params)

    # 1) Exact f32 path (tight tolerance vs. the JAX reference).
    prepared_f32 = prepare_params(params, jnp.float32)
    out32 = jax.block_until_ready(policy_forward(x, prepared_f32))
    assert out32.shape == (B, ACTION_DIM)
    assert jnp.allclose(out32, ref, atol=1e-5, rtol=1e-5), "f32 mismatch vs reference"

    # 2) Auto dtype path (bf16 MXU operands on v6e/v7x, f32 elsewhere).
    prepared_auto = prepare_params(params)
    out_auto = jax.block_until_ready(policy_forward(x, prepared_auto))
    tol = 1e-5 if prepared_auto[1].dtype == jnp.float32 else 5e-2
    assert jnp.allclose(out_auto, ref, atol=tol, rtol=tol), "auto-dtype mismatch vs reference"

    # 3) Tiny-batch path (single env step style), f32.
    x_small = jax.random.normal(kx, (5, STATE_DIM), dtype=jnp.float32)
    out_small = jax.block_until_ready(policy_forward(x_small, prepared_f32))
    assert out_small.shape == (5, ACTION_DIM)
    assert jnp.allclose(out_small, reference_forward(x_small, params), atol=1e-5, rtol=1e-5)

    print("KERNEL_OK")
</pallas_src>

<mosaic_0001>
module attributes {stable_mosaic.version = 11 : i64} {
  func.func @policy_kernel(%arg0: i32, %arg1: memref<8x256xf32, #tpu.memory_space<vmem>>, %arg2: memref<64x8xf32, #tpu.memory_space<vmem>>, %arg3: memref<64x64xf32, #tpu.memory_space<vmem>>, %arg4: memref<64x1xf32, #tpu.memory_space<vmem>>, %arg5: memref<1x64xf32, #tpu.memory_space<vmem>>, %arg6: memref<1x1xf32, #tpu.memory_space<vmem>>, %arg7: memref<1x256xf32, #tpu.memory_space<vmem>>) attributes {dimension_semantics = [#tpu.dimension_semantics<parallel>], iteration_bounds = array<i64: 2>, scalar_prefetch = 0 : i64, scratch_operands = 0 : i64, tpu.core_type = #tpu.core_type<tc>, window_params = [{transform_indices = @transform_0, window_bounds = array<i64: 8, 256>}, {pipeline_mode = #tpu.pipeline_mode<synchronous>, transform_indices = @transform_1, window_bounds = array<i64: 64, 8>}, {pipeline_mode = #tpu.pipeline_mode<synchronous>, transform_indices = @transform_2, window_bounds = array<i64: 64, 64>}, {pipeline_mode = #tpu.pipeline_mode<synchronous>, transform_indices = @transform_3, window_bounds = array<i64: 64, 1>}, {pipeline_mode = #tpu.pipeline_mode<synchronous>, transform_indices = @transform_4, window_bounds = array<i64: 1, 64>}, {pipeline_mode = #tpu.pipeline_mode<synchronous>, transform_indices = @transform_5, window_bounds = array<i64: 1, 1>}, {transform_indices = @transform_6, window_bounds = array<i64: 1, 256>}]} {
    %c0 = arith.constant 0 : index
    %c0_0 = arith.constant 0 : index
    %0 = vector.load %arg2[%c0, %c0_0] : memref<64x8xf32, #tpu.memory_space<vmem>>, vector<64x8xf32>
    %c0_1 = arith.constant 0 : index
    %c0_2 = arith.constant 0 : index
    %1 = vector.load %arg1[%c0_1, %c0_2] : memref<8x256xf32, #tpu.memory_space<vmem>>, vector<8x256xf32>
    %cst = arith.constant dense<0.000000e+00> : vector<64x256xf32>
    %2 = tpu.matmul %0, %1, %cst {dimension_numbers = #tpu.dot_dimension_numbers<[1], [0], [0], [1], [0, 0, 1, 1], [], []>} : vector<64x8xf32>, vector<8x256xf32>, vector<64x256xf32> -> vector<64x256xf32>
    %cst_3 = arith.constant 0.000000e+00 : f32
    %3 = vector.broadcast %cst_3 : f32 to vector<64x256xf32>
    %4 = arith.maximumf %2, %3 : vector<64x256xf32>
    %c0_4 = arith.constant 0 : index
    %c0_5 = arith.constant 0 : index
    %5 = vector.load %arg3[%c0_4, %c0_5] : memref<64x64xf32, #tpu.memory_space<vmem>>, vector<64x64xf32>
    %cst_6 = arith.constant dense<0.000000e+00> : vector<64x256xf32>
    %6 = tpu.matmul %5, %4, %cst_6 {dimension_numbers = #tpu.dot_dimension_numbers<[1], [0], [0], [1], [0, 0, 1, 1], [], []>} : vector<64x64xf32>, vector<64x256xf32>, vector<64x256xf32> -> vector<64x256xf32>
    %c0_7 = arith.constant 0 : index
    %c0_8 = arith.constant 0 : index
    %7 = vector.load %arg4[%c0_7, %c0_8] : memref<64x1xf32, #tpu.memory_space<vmem>>, vector<64x1xf32>
    %8 = vector.broadcast %7 : vector<64x1xf32> to vector<64x256xf32>
    %9 = arith.addf %6, %8 : vector<64x256xf32>
    %cst_9 = arith.constant 0.000000e+00 : f32
    %10 = vector.broadcast %cst_9 : f32 to vector<64x256xf32>
    %11 = arith.maximumf %9, %10 : vector<64x256xf32>
    %c0_10 = arith.constant 0 : index
    %c0_11 = arith.constant 0 : index
    %12 = vector.load %arg5[%c0_10, %c0_11] : memref<1x64xf32, #tpu.memory_space<vmem>>, vector<1x64xf32>
    %cst_12 = arith.constant dense<0.000000e+00> : vector<1x256xf32>
    %13 = tpu.matmul %12, %11, %cst_12 {dimension_numbers = #tpu.dot_dimension_numbers<[1], [0], [0], [1], [0, 0, 1, 1], [], []>} : vector<1x64xf32>, vector<64x256xf32>, vector<1x256xf32> -> vector<1x256xf32>
    %c0_13 = arith.constant 0 : index
    %c0_14 = arith.constant 0 : index
    %14 = vector.load %arg6[%c0_13, %c0_14] : memref<1x1xf32, #tpu.memory_space<vmem>>, vector<1x1xf32>
    %15 = vector.broadcast %14 : vector<1x1xf32> to vector<1x256xf32>
    %16 = arith.addf %13, %15 : vector<1x256xf32>
    %17 = math.tanh %16 : vector<1x256xf32>
    %c0_15 = arith.constant 0 : index
    %c0_16 = arith.constant 0 : index
    %18 = vector.load %arg7[%c0_15, %c0_16] : memref<1x256xf32, #tpu.memory_space<vmem>>, vector<1x256xf32>
    tpu.vector_store %arg7[%c0_15, %c0_16], %17 {strides = array<i32>} : memref<1x256xf32, #tpu.memory_space<vmem>>, vector<1x256xf32>,
    return
  }
  func.func @transform_0(%arg0: i32) -> (i32, i32) {
    %c0_i32 = arith.constant 0 : i32
    %c0_i32_0 = arith.constant 0 : i32
    return %c0_i32, %arg0 : i32, i32
  }
  func.func @transform_1(%arg0: i32) -> (i32, i32) {
    %c0_i32 = arith.constant 0 : i32
    %c0_i32_0 = arith.constant 0 : i32
    %c0_i32_1 = arith.constant 0 : i32
    return %c0_i32, %c0_i32_0 : i32, i32
  }
  func.func @transform_2(%arg0: i32) -> (i32, i32) {
    %c0_i32 = arith.constant 0 : i32
    %c0_i32_0 = arith.constant 0 : i32
    %c0_i32_1 = arith.constant 0 : i32
    return %c0_i32, %c0_i32_0 : i32, i32
  }
  func.func @transform_3(%arg0: i32) -> (i32, i32) {
    %c0_i32 = arith.constant 0 : i32
    %c0_i32_0 = arith.constant 0 : i32
    %c0_i32_1 = arith.constant 0 : i32
    return %c0_i32, %c0_i32_0 : i32, i32
  }
  func.func @transform_4(%arg0: i32) -> (i32, i32) {
    %c0_i32 = arith.constant 0 : i32
    %c0_i32_0 = arith.constant 0 : i32
    %c0_i32_1 = arith.constant 0 : i32
    return %c0_i32, %c0_i32_0 : i32, i32
  }
  func.func @transform_5(%arg0: i32) -> (i32, i32) {
    %c0_i32 = arith.constant 0 : i32
    %c0_i32_0 = arith.constant 0 : i32
    %c0_i32_1 = arith.constant 0 : i32
    return %c0_i32, %c0_i32_0 : i32, i32
  }
  func.func @transform_6(%arg0: i32) -> (i32, i32) {
    %c0_i32 = arith.constant 0 : i32
    %c0_i32_0 = arith.constant 0 : i32
    return %c0_i32, %arg0 : i32, i32
  }
}

</mosaic_0001>

<llo_original>
// kernel: _policy_forward_impl.1
$region0: #{_policy_forward_impl.1}
  #allocation0 [shape = 'u32[]', space=smem, size = 0x4, offset = 0x4, fixed_abs, tag = 'smem constant byte address 0x4 - core index']
  #allocation1 [shape = 'u32[144,128]{1,0:T(1,128)}', space=vmem, size = 0x12000, scoped, tag = 'internal scratch']
  #allocation2 [shape = 'f32[1,1]{1,0:T(1,128)S(1)}', space=vmem, size = 0x200, scoped, tag = 'scoped memory for _policy_forward_impl.1']
  %s0 = inlined_call_operand.vmem [shape: f32[8,512], index: 0, kind: input, shape index: {}]
  %s1 = inlined_call_operand.vmem [shape: f32[64,8], index: 1, kind: input, shape index: {}]
  %s2 = inlined_call_operand.vmem [shape: f32[64,64], index: 2, kind: input, shape index: {}]
  %s3 = inlined_call_operand.vmem [shape: f32[64,1], index: 3, kind: input, shape index: {}]
  %s4 = inlined_call_operand.vmem [shape: f32[1,64], index: 4, kind: input, shape index: {}]
  %s5 = inlined_call_operand.<no memory space> [shape: f32[1,1], index: 5, kind: input, shape index: {}]
  %s6 = inlined_call_operand.vmem [shape: f32[1,512], index: 6, kind: output, shape index: {}]
  %s7 = sld [smem:[#allocation0]]
  $region57: #{_policy_forward_impl.1} parent=0
    _
  %s9 = ssub.s32 1, %s7
  %s10 = scalar_select 0, %s9, %s7
  %v11 = vstv %s5
  %12 = vst [vmem:[#allocation2] sm:$0x1] %v11
  loop: start=0, step=1, limit=4
  $region2: #{_policy_forward_impl.1} parent=0 // loop_pre_header
    _
  $region3: #{_policy_forward_impl.1} parent=0 // loop_header
    %s14 = sphi 0, %s18
    %p15 = scmp.ge.s32.totalorder %s14, 4
    %s24 = sphi 0, %s26
    %s27 = sphi 0, %s24
    %s28 = sphi 0, %s27
    %s44 = sphi 0, %s28
    %s48 = sphi 0, %s48
    %s50 = sphi 0, %s48
    %s51 = sphi 0, %s50
    %s65 = sphi 0, %s51
    %s69 = sphi 0, %s69
    %s71 = sphi 0, %s69
    %s72 = sphi 0, %s71
    %s86 = sphi 0, %s72
    %s90 = sphi 0, %s90
    %s92 = sphi 0, %s90
    %s93 = sphi 0, %s92
    %s107 = sphi 0, %s93
    %s111 = sphi 0, %s111
    %s113 = sphi 0, %s111
    %s114 = sphi 0, %s113
    %s128 = sphi 0, %s114
    %s132 = sphi 0, %s132
    %s134 = sphi 0, %s132
    %s135 = sphi 0, %s134
    %s149 = sphi 0, %s135
    %s155 = sphi 0, %s157
    %s158 = sphi 0, %s155
    %s159 = sphi 0, %s158
    %s175 = sphi 0, %s159
  $region4: #{_policy_forward_impl.1} parent=0 // loop_header_branch
    %17 = sbr.rel (%p15) target = $region8
  $region5: #{_policy_forward_impl.1} parent=0 // loop_body
    %s19 = ssub.s32 %s14, 1
    %s20 = ssub.s32 %s14, 2
    %s21 = sadd.s32 %s14, 1
    %s22 = ssub.s32 %s14, %s21
    %p23 = scmp.eq.s32.totalorder %s22, 0
    %s25 = sadd.s32 %s24, 1
    %s26 = scalar_select %p23, %s24, %s25
    %p29 = pneg %p23
    %p30 = scmp.eq.s32.totalorder %s14, 1
    %p31 = por %p29, %p30
    %p32 = scmp.ne.s32.totalorder %s24, %s27
    %p33 = scmp.eq.s32.totalorder %s14, 0
    %p34 = por %p32, %p33
    %p35 = scmp.ne.s32.totalorder %s24, %s27
    %p36 = scmp.eq.s32.totalorder %s19, 1
    %p37 = por %p35, %p36
    %p38 = scmp.ne.s32.totalorder %s27, %s28
    %p39 = scmp.eq.s32.totalorder %s19, 0
    %p40 = por %p38, %p39
    %p41 = scmp.ne.s32.totalorder %s27, %s28
    %p42 = scmp.eq.s32.totalorder %s20, 1
    %p43 = por %p41, %p42
    %p45 = scmp.ne.s32.totalorder %s28, %s44
    %p46 = scmp.eq.s32.totalorder %s20, 0
    %p47 = por %p45, %p46
    %s49 = sadd.s32 %s48, 1
    %p52 = scmp.eq.s32.totalorder %s14, 1
    %p53 = scmp.ne.s32.totalorder %s48, %s50
    %p54 = scmp.eq.s32.totalorder %s14, 0
    %p55 = por %p53, %p54
    %p56 = scmp.ne.s32.totalorder %s48, %s50
    %p57 = scmp.eq.s32.totalorder %s19, 1
    %p58 = por %p56, %p57
    %p59 = scmp.ne.s32.totalorder %s50, %s51
    %p60 = scmp.eq.s32.totalorder %s19, 0
    %p61 = por %p59, %p60
    %p62 = scmp.ne.s32.totalorder %s50, %s51
    %p63 = scmp.eq.s32.totalorder %s20, 1
    %p64 = por %p62, %p63
    %p66 = scmp.ne.s32.totalorder %s51, %s65
    %p67 = scmp.eq.s32.totalorder %s20, 0
    %p68 = por %p66, %p67
    %s70 = sadd.s32 %s69, 1
    %p73 = scmp.eq.s32.totalorder %s14, 1
    %p74 = scmp.ne.s32.totalorder %s69, %s71
    %p75 = scmp.eq.s32.totalorder %s14, 0
    %p76 = por %p74, %p75
    %p77 = scmp.ne.s32.totalorder %s69, %s71
    %p78 = scmp.eq.s32.totalorder %s19, 1
    %p79 = por %p77, %p78
    %p80 = scmp.ne.s32.totalorder %s71, %s72
    %p81 = scmp.eq.s32.totalorder %s19, 0
    %p82 = por %p80, %p81
    %p83 = scmp.ne.s32.totalorder %s71, %s72
    %p84 = scmp.eq.s32.totalorder %s20, 1
    %p85 = por %p83, %p84
    %p87 = scmp.ne.s32.totalorder %s72, %s86
    %p88 = scmp.eq.s32.totalorder %s20, 0
    %p89 = por %p87, %p88
    %s91 = sadd.s32 %s90, 1
    %p94 = scmp.eq.s32.totalorder %s14, 1
    %p95 = scmp.ne.s32.totalorder %s90, %s92
    %p96 = scmp.eq.s32.totalorder %s14, 0
    %p97 = por %p95, %p96
    %p98 = scmp.ne.s32.totalorder %s90, %s92
    %p99 = scmp.eq.s32.totalorder %s19, 1
    %p100 = por %p98, %p99
    %p101 = scmp.ne.s32.totalorder %s92, %s93
    %p102 = scmp.eq.s32.totalorder %s19, 0
    %p103 = por %p101, %p102
    %p104 = scmp.ne.s32.totalorder %s92, %s93
    %p105 = scmp.eq.s32.totalorder %s20, 1
    %p106 = por %p104, %p105
    %p108 = scmp.ne.s32.totalorder %s93, %s107
    %p109 = scmp.eq.s32.totalorder %s20, 0
    %p110 = por %p108, %p109
    %s112 = sadd.s32 %s111, 1
    %p115 = scmp.eq.s32.totalorder %s14, 1
    %p116 = scmp.ne.s32.totalorder %s111, %s113
    %p117 = scmp.eq.s32.totalorder %s14, 0
    %p118 = por %p116, %p117
    %p119 = scmp.ne.s32.totalorder %s111, %s113
    %p120 = scmp.eq.s32.totalorder %s19, 1
    %p121 = por %p119, %p120
    %p122 = scmp.ne.s32.totalorder %s113, %s114
    %p123 = scmp.eq.s32.totalorder %s19, 0
    %p124 = por %p122, %p123
    %p125 = scmp.ne.s32.totalorder %s113, %s114
    %p126 = scmp.eq.s32.totalorder %s20, 1
    %p127 = por %p125, %p126
    %p129 = scmp.ne.s32.totalorder %s114, %s128
    %p130 = scmp.eq.s32.totalorder %s20, 0
    %p131 = por %p129, %p130
    %s133 = sadd.s32 %s132, 1
    %p136 = scmp.eq.s32.totalorder %s14, 1
    %p137 = scmp.ne.s32.totalorder %s132, %s134
    %p138 = scmp.eq.s32.totalorder %s14, 0
    %p139 = por %p137, %p138
    %p140 = scmp.ne.s32.totalorder %s132, %s134
    %p141 = scmp.eq.s32.totalorder %s19, 1
    %p142 = por %p140, %p141
    %p143 = scmp.ne.s32.totalorder %s134, %s135
    %p144 = scmp.eq.s32.totalorder %s19, 0
    %p145 = por %p143, %p144
    %p146 = scmp.ne.s32.totalorder %s134, %s135
    %p147 = scmp.eq.s32.totalorder %s20, 1
    %p148 = por %p146, %p147
    %p150 = scmp.ne.s32.totalorder %s135, %s149
    %p151 = scmp.eq.s32.totalorder %s20, 0
    %p152 = por %p150, %p151
    %s153 = ssub.s32 %s14, %s21
    %p154 = scmp.eq.s32.totalorder %s153, 0
    %s156 = sadd.s32 %s155, 1
    %s157 = scalar_select %p154, %s155, %s156
    %p160 = pneg %p154
    %p161 = scmp.eq.s32.totalorder %s14, 1
    %p162 = por %p160, %p161
    %p163 = scmp.ne.s32.totalorder %s155, %s158
    %p164 = scmp.eq.s32.totalorder %s14, 0
    %p165 = por %p163, %p164
    %p166 = scmp.ne.s32.totalorder %s155, %s158
    %p167 = scmp.eq.s32.totalorder %s19, 1
    %p168 = por %p166, %p167
    %p169 = scmp.ne.s32.totalorder %s158, %s159
    %p170 = scmp.eq.s32.totalorder %s19, 0
    %p171 = por %p169, %p170
    %p172 = scmp.ne.s32.totalorder %s158, %s159
    %p173 = scmp.eq.s32.totalorder %s20, 1
    %p174 = por %p172, %p173
    %p176 = scmp.ne.s32.totalorder %s159, %s175
    %p177 = scmp.eq.s32.totalorder %s20, 0
    %p178 = por %p176, %p177
    %p179 = scmp.le.s32.totalorder 1, %s14
    %p180 = scmp.lt.s32.totalorder %s14, 3
    %p181 = pnand %p179, %p180
    %p182 = pneg %p181
    // Predicated region
    $region9: #{_policy_forward_impl.1} parent=5 // pred_check
      _
    $region10: #{_policy_forward_impl.1} parent=5 // pred_check_branch
      %184 = sbr.rel (%p181) target = $region12
    $region11: #{_policy_forward_impl.1} parent=5 // pred_region
      %s185 = ssub.s32 %s14, 1
      // Predicated region
      $region13: #{_policy_forward_impl.1} parent=11 // pred_check
        %p186 = pneg %p61
      $region14: #{_policy_forward_impl.1} parent=11 // pred_check_branch
        %188 = sbr.rel (%p186) target = $region16
      $region15: #{_policy_forward_impl.1} parent=11 // pred_region
        _
      $region16: #{_policy_forward_impl.1} parent=11 // pred_fallthru
        _
      // Predicated region
      $region17: #{_policy_forward_impl.1} parent=11 // pred_check
        %p189 = pneg %p82
      $region18: #{_policy_forward_impl.1} parent=11 // pred_check_branch
        %191 = sbr.rel (%p189) target = $region20
      $region19: #{_policy_forward_impl.1} parent=11 // pred_region
        _
      $region20: #{_policy_forward_impl.1} parent=11 // pred_fallthru
        _
      // Predicated region
      $region21: #{_policy_forward_impl.1} parent=11 // pred_check
        %p192 = pneg %p103
      $region22: #{_policy_forward_impl.1} parent=11 // pred_check_branch
        %194 = sbr.rel (%p192) target = $region24
      $region23: #{_policy_forward_impl.1} parent=11 // pred_region
        _
      $region24: #{_policy_forward_impl.1} parent=11 // pred_fallthru
        _
      // Predicated region
      $region25: #{_policy_forward_impl.1} parent=11 // pred_check
        %p195 = pneg %p124
      $region26: #{_policy_forward_impl.1} parent=11 // pred_check_branch
        %197 = sbr.rel (%p195) target = $region28
      $region27: #{_policy_forward_impl.1} parent=11 // pred_region
        _
      $region28: #{_policy_forward_impl.1} parent=11 // pred_fallthru
        _
      // Predicated region
      $region29: #{_policy_forward_impl.1} parent=11 // pred_check
        %p198 = pneg %p145
      $region30: #{_policy_forward_impl.1} parent=11 // pred_check_branch
        %200 = sbr.rel (%p198) target = $region32
      $region31: #{_policy_forward_impl.1} parent=11 // pred_region
        _
      $region32: #{_policy_forward_impl.1} parent=11 // pred_fallthru
        _
    $region12: #{_policy_forward_impl.1} parent=5 // pred_fallthru
      _
    %p201 = scmp.lt.s32.totalorder %s14, 2
    // Predicated region
    $region33: #{_policy_forward_impl.1} parent=5 // pred_check
      %p202 = pneg %p201
    $region34: #{_policy_forward_impl.1} parent=5 // pred_check_branch
      %204 = sbr.rel (%p202) target = $region36
    $region35: #{_policy_forward_impl.1} parent=5 // pred_region
      // Predicated region
      $region37: #{_policy_forward_impl.1} parent=35 // pred_check
        %p205 = pneg %p34
      $region38: #{_policy_forward_impl.1} parent=35 // pred_check_branch
        %207 = sbr.rel (%p205) target = $region40
      $region39: #{_policy_forward_impl.1} parent=35 // pred_region
        %s208 = smul.u32 2, %s14
        %p209 = scmp.lt.s32.totalorder %s208, 3
        %s210 = scalar_select %p209, %s208, 3
        %s211 = smul.addr %s210, 8
        %s212 = scalar_lea.vmem %s0, %s211
        %s213 = smul.u32 2, %s14
      $region40: #{_policy_forward_impl.1} parent=35 // pred_fallthru
        _
    $region36: #{_policy_forward_impl.1} parent=5 // pred_fallthru
      _
    %p214 = scmp.le.s32.totalorder 1, %s14
    %p215 = scmp.lt.s32.totalorder %s14, 3
    %p216 = pnand %p214, %p215
    %p217 = pneg %p216
    // Predicated region
    $region41: #{_policy_forward_impl.1} parent=5 // pred_check
      _
    $region42: #{_policy_forward_impl.1} parent=5 // pred_check_branch
      %219 = sbr.rel (%p216) target = $region44
    $region43: #{_policy_forward_impl.1} parent=5 // pred_region
      %s220 = ssub.s32 %s14, 1
      %s221 = smul.u32 2, %s19
      %p222 = scmp.lt.s32.totalorder %s221, 3
      %s223 = scalar_select %p222, %s221, 3
      %s224 = smul.addr %s223, 8
      %s225 = scalar_lea.vmem %s0, %s224
      %p226 = pneg %p40
      %p227 = pneg %p37
      %p228 = pneg %p61
      %p229 = pneg %p58
      %p230 = pneg %p82
      %p231 = pneg %p79
      %p232 = pneg %p103
      %p233 = pneg %p100
      %p234 = pneg %p124
      %p235 = pneg %p121
      %p236 = pneg %p145
      %p237 = pneg %p142
      %p238 = pneg %p171
      %p239 = pneg %p168
      %s240 = smul.u32 2, %s19
      %p241 = scmp.lt.s32.totalorder %s240, 3
      %s242 = scalar_select %p241, %s240, 3
      %s243 = scalar_lea.vmem %s6, %s242
      %s244 = smul.u32 2, %s19
      %p245 = scmp.lt.s32.totalorder %s244, 3
      %s246 = scalar_select %p245, %s244, 3
      %s247 = smul.addr %s246, 8
      %s248 = scalar_lea.vmem %s0, %s247
      %s249 = smul.u32 2, %s19
      %s250 = smul.u32 2, %s19
      %p251 = scmp.lt.s32.totalorder %s250, 3
      %s252 = scalar_select %p251, %s250, 3
      %s253 = scalar_lea.vmem %s6, %s252
      %s254 = smul.u32 2, %s19
      %v255 = vld [vmem:[%s1] sm:$0xff]
      %v256 = vld [vmem:[%s1 + $0x8] sm:$0xff]
      %v257 = vld [vmem:[%s1 + $0x10] sm:$0xff]
      %v258 = vld [vmem:[%s1 + $0x18] sm:$0xff]
      %v259 = vld [vmem:[%s1 + $0x20] sm:$0xff]
      %v260 = vld [vmem:[%s1 + $0x28] sm:$0xff]
      %v261 = vld [vmem:[%s1 + $0x30] sm:$0xff]
      %v262 = vld [vmem:[%s1 + $0x38] sm:$0xff]
      %v263 = vld [vmem:[%s248] sm:$0xff]
      %v264 = vld [vmem:[%s248 + $0x8] sm:$0xff]
      %vm265 = vcmask 64512
      %v267 = vsel %vm265, %v255, 0
      %v270 = vsel %vm265, %v256, 0
      %v273 = vsel %vm265, %v257, 0
      %v276 = vsel %vm265, %v258, 0
      %v279 = vsel %vm265, %v259, 0
      %v282 = vsel %vm265, %v260, 0
      %v285 = vsel %vm265, %v261, 0
      %v288 = vsel %vm265, %v262, 0
      %290 = vmatprep.subr.mxu0 %v264
      %291 = vmatpush1.msra.mxu0 %v263
      %292 = vmatprep.subr.mxu0 0.0
      %293 = vmatpush1.msra.mxu0 0.0
      %294 = vmatprep.subr.mxu0 0.0
      %295 = vmatpush1.msra.mxu0 0.0
      %296 = vmatprep.subr.mxu0 0.0
      %297 = vmatpush1.msra.mxu0 0.0
      %298 = vmatprep.subr.mxu0 0.0
      %299 = vmatpush1.msra.mxu0 0.0
      %300 = vmatprep.subr.mxu0 0.0
      %301 = vmatpush1.msra.mxu0 0.0
      %302 = vmatprep.subr.mxu0 0.0
      %303 = vmatpush1.msra.mxu0 0.0
      %304 = vmatprep.subr.mxu0 0.0
      %305 = vmatpush1.msra.mxu0 0.0
      %306 = vmatprep.subr.mxu0 0.0
      %307 = vmatpush1.msra.mxu0 0.0
      %308 = vmatprep.subr.mxu0 0.0
      %309 = vmatpush1.msra.mxu0 0.0
      %310 = vmatprep.subr.mxu0 0.0
      %311 = vmatpush1.msra.mxu0 0.0
      %312 = vmatprep.subr.mxu0 0.0
      %313 = vmatpush1.msra.mxu0 0.0
      %314 = vmatprep.subr.mxu0 0.0
      %315 = vmatpush1.msra.mxu0 0.0
      %316 = vmatprep.subr.mxu0 0.0
      %317 = vmatpush1.msra.mxu0 0.0
      %318 = vmatprep.subr.mxu0 0.0
      %319 = vmatpush1.msra.mxu0 0.0
      %320 = vmatprep.subr.mxu0 0.0
      %321 = vmatpush1.msra.mxu0 0.0
      %322 = vmatprep.subr.mxu0 0.0
      %323 = vmatpush1.msra.mxu0 0.0
      %324 = vmatprep.subr.mxu0 0.0
      %325 = vmatpush1.msra.mxu0 0.0
      %326 = vmatprep.subr.mxu0 0.0
      %327 = vmatpush1.msra.mxu0 0.0
      %328 = vmatprep.subr.mxu0 0.0
      %329 = vmatpush1.msra.mxu0 0.0
      %330 = vmatprep.subr.mxu0 0.0
      %331 = vmatpush1.msra.mxu0 0.0
      %332 = vmatprep.subr.mxu0 0.0
      %333 = vmatpush1.msra.mxu0 0.0
      %334 = vmatprep.subr.mxu0 0.0
      %335 = vmatpush1.msra.mxu0 0.0
      %336 = vmatprep.subr.mxu0 0.0
      %337 = vmatpush1.msra.mxu0 0.0
      %338 = vmatprep.subr.mxu0 0.0
      %339 = vmatpush1.msra.mxu0 0.0
      %340 = vmatprep.subr.mxu0 0.0
      %341 = vmatpush1.msra.mxu0 0.0
      %342 = vmatprep.subr.mxu0 0.0
      %343 = vmatpush1.msra.mxu0 0.0
      %344 = vmatprep.subr.mxu0 0.0
      %345 = vmatpush1.msra.mxu0 0.0
      %346 = vmatprep.subr.mxu0 0.0
      %347 = vmatpush1.msra.mxu0 0.0
      %348 = vmatprep.subr.mxu0 0.0
      %349 = vmatpush1.msra.mxu0 0.0
      %350 = vmatprep.subr.mxu0 0.0
      %351 = vmatpush1.msra.mxu0 0.0
      %352 = vmatprep.subr.mxu0 0.0
      %353 = vmatpush1.msra.mxu0 0.0
      %354 = vmatprep.mubr.f32.mxu0 0.0
      %355 = vmatmul.mubr.f32.gmra.mrb[0].mxu0 %v267
      %v356 = vpop.f32.mrb[0].mxu0
      %v357 = vadd.f32 0.0, %v356
      %v358 = vpop.f32.mrb[0].mxu0
      %v359 = vadd.f32 0.0, %v358
      %360 = vmatprep.mubr.f32.mxu0 0.0
      %361 = vmatmul.mubr.f32.gmra.mrb[0].mxu0 %v270
      %v362 = vpop.f32.mrb[0].mxu0
      %v363 = vadd.f32 0.0, %v362
      %v364 = vpop.f32.mrb[0].mxu0
      %v365 = vadd.f32 0.0, %v364
      %366 = vmatprep.mubr.f32.mxu0 0.0
      %367 = vmatmul.mubr.f32.gmra.mrb[0].mxu0 %v273
      %v368 = vpop.f32.mrb[0].mxu0
      %v369 = vadd.f32 0.0, %v368
      %v370 = vpop.f32.mrb[0].mxu0
      %v371 = vadd.f32 0.0, %v370
      %372 = vmatprep.mubr.f32.mxu0 0.0
      %373 = vmatmul.mubr.f32.gmra.mrb[0].mxu0 %v276
      %v374 = vpop.f32.mrb[0].mxu0
      %v375 = vadd.f32 0.0, %v374
      %v376 = vpop.f32.mrb[0].mxu0
      %v377 = vadd.f32 0.0, %v376
      %378 = vmatprep.mubr.f32.mxu0 0.0
      %379 = vmatmul.mubr.f32.gmra.mrb[0].mxu0 %v279
      %v380 = vpop.f32.mrb[0].mxu0
      %v381 = vadd.f32 0.0, %v380
      %v382 = vpop.f32.mrb[0].mxu0
      %v383 = vadd.f32 0.0, %v382
      %384 = vmatprep.mubr.f32.mxu0 0.0
      %385 = vmatmul.mubr.f32.gmra.mrb[0].mxu0 %v282
      %v386 = vpop.f32.mrb[0].mxu0
      %v387 = vadd.f32 0.0, %v386
      %v388 = vpop.f32.mrb[0].mxu0
      %v389 = vadd.f32 0.0, %v388
      %390 = vmatprep.mubr.f32.mxu0 0.0
      %391 = vmatmul.mubr.f32.gmra.mrb[0].mxu0 %v285
      %v392 = vpop.f32.mrb[0].mxu0
      %v393 = vadd.f32 0.0, %v392
      %v394 = vpop.f32.mrb[0].mxu0
      %v395 = vadd.f32 0.0, %v394
      %396 = vmatprep.mubr.f32.mxu0 0.0
      %397 = vmatmul.mubr.f32.gmra.mrb[0].mxu0 %v288
      %v398 = vpop.f32.mrb[0].mxu0
      %v399 = vadd.f32 0.0, %v398
      %v400 = vpop.f32.mrb[0].mxu0
      %v401 = vadd.f32 0.0, %v400
      %402 = vdwg.mxu0
      %v403 = vmax.f32 %v357, 0.0
      %v404 = vmax.f32 %v359, 0.0
      %v405 = vmax.f32 %v363, 0.0
      %v406 = vmax.f32 %v365, 0.0
      %v407 = vmax.f32 %v369, 0.0
      %v408 = vmax.f32 %v371, 0.0
      %v409 = vmax.f32 %v375, 0.0
      %v410 = vmax.f32 %v377, 0.0
      %v411 = vmax.f32 %v381, 0.0
      %v412 = vmax.f32 %v383, 0.0
      %v413 = vmax.f32 %v387, 0.0
      %v414 = vmax.f32 %v389, 0.0
      %v415 = vmax.f32 %v393, 0.0
      %v416 = vmax.f32 %v395, 0.0
      %v417 = vmax.f32 %v399, 0.0
      %v418 = vmax.f32 %v401, 0.0
      %v419 = vld [vmem:[%s2] sm:$0xff]
      %v420 = vld [vmem:[%s2 + $0x8] sm:$0xff]
      %v421 = vld [vmem:[%s2 + $0x10] sm:$0xff]
      %v422 = vld [vmem:[%s2 + $0x18] sm:$0xff]
      %v423 = vld [vmem:[%s2 + $0x20] sm:$0xff]
      %v424 = vld [vmem:[%s2 + $0x28] sm:$0xff]
      %v425 = vld [vmem:[%s2 + $0x30] sm:$0xff]
      %v426 = vld [vmem:[%s2 + $0x38] sm:$0xff]
      %v427 = vld [vmem:[%s3] sm:$0xff]
      %v428 = vld [vmem:[%s3 + $0x8] sm:$0xff]
      %v429 = vld [vmem:[%s3 + $0x10] sm:$0xff]
      %v430 = vld [vmem:[%s3 + $0x18] sm:$0xff]
      %v431 = vld [vmem:[%s3 + $0x20] sm:$0xff]
      %v432 = vld [vmem:[%s3 + $0x28] sm:$0xff]
      %v433 = vld [vmem:[%s3 + $0x30] sm:$0xff]
      %v434 = vld [vmem:[%s3 + $0x38] sm:$0xff]
      %436 = vset.pattern.permute.xlu0 0
      %437 = vperm.xlu0 %436, %v427
      %v438 = vpop.permute.xlu0 %437
      %441 = vset.pattern.permute.xlu0 0
      %442 = vperm.xlu0 %441, %v428
      %v443 = vpop.permute.xlu0 %442
      %446 = vset.pattern.permute.xlu0 0
      %447 = vperm.xlu0 %446, %v429
      %v448 = vpop.permute.xlu0 %447
      %451 = vset.pattern.permute.xlu0 0
      %452 = vperm.xlu0 %451, %v430
      %v453 = vpop.permute.xlu0 %452
      %456 = vset.pattern.permute.xlu0 0
      %457 = vperm.xlu0 %456, %v431
      %v458 = vpop.permute.xlu0 %457
      %461 = vset.pattern.permute.xlu0 0
      %462 = vperm.xlu0 %461, %v432
      %v463 = vpop.permute.xlu0 %462
      %466 = vset.pattern.permute.xlu0 0
      %467 = vperm.xlu0 %466, %v433
      %v468 = vpop.permute.xlu0 %467
      %471 = vset.pattern.permute.xlu0 0
      %472 = vperm.xlu0 %471, %v434
      %v473 = vpop.permute.xlu0 %472
      %vm475 = vcmask 523264
      %v477 = vsel %vm475, %v419, 0
      %v480 = vsel %vm475, %v420, 0
      %v483 = vsel %vm475, %v421, 0
      %v486 = vsel %vm475, %v422, 0
      %v489 = vsel %vm475, %v423, 0
      %v492 = vsel %vm475, %v424, 0
      %v495 = vsel %vm475, %v425, 0
      %v498 = vsel %vm475, %v426, 0
      %500 = vmatprep.subr.mxu0 %v404
      %501 = vmatpush1.msra.mxu0 %v403
      %502 = vmatprep.subr.mxu0 %v406
      %503 = vmatpush1.msra.mxu0 %v405
      %504 = vmatprep.subr.mxu0 %v408
      %505 = vmatpush1.msra.mxu0 %v407
      %506 = vmatprep.subr.mxu0 %v410
      %507 = vmatpush1.msra.mxu0 %v409
      %508 = vmatprep.subr.mxu0 %v412
      %509 = vmatpush1.msra.mxu0 %v411
      %510 = vmatprep.subr.mxu0 %v414
      %511 = vmatpush1.msra.mxu0 %v413
      %512 = vmatprep.subr.mxu0 %v416
      %513 = vmatpush1.msra.mxu0 %v415
      %514 = vmatprep.subr.mxu0 %v418
      %515 = vmatpush1.msra.mxu0 %v417
      %516 = vmatprep.subr.mxu0 0.0
      %517 = vmatpush1.msra.mxu0 0.0
      %518 = vmatprep.subr.mxu0 0.0
      %519 = vmatpush1.msra.mxu0 0.0
      %520 = vmatprep.subr.mxu0 0.0
      %521 = vmatpush1.msra.mxu0 0.0
      %522 = vmatprep.subr.mxu0 0.0
      %523 = vmatpush1.msra.mxu0 0.0
      %524 = vmatprep.subr.mxu0 0.0
      %525 = vmatpush1.msra.mxu0 0.0
      %526 = vmatprep.subr.mxu0 0.0
      %527 = vmatpush1.msra.mxu0 0.0
      %528 = vmatprep.subr.mxu0 0.0
      %529 = vmatpush1.msra.mxu0 0.0
      %530 = vmatprep.subr.mxu0 0.0
      %531 = vmatpush1.msra.mxu0 0.0
      %532 = vmatprep.subr.mxu0 0.0
      %533 = vmatpush1.msra.mxu0 0.0
      %534 = vmatprep.subr.mxu0 0.0
      %535 = vmatpush1.msra.mxu0 0.0
      %536 = vmatprep.subr.mxu0 0.0
      %537 = vmatpush1.msra.mxu0 0.0
      %538 = vmatprep.subr.mxu0 0.0
      %539 = vmatpush1.msra.mxu0 0.0
      %540 = vmatprep.subr.mxu0 0.0
      %541 = vmatpush1.msra.mxu0 0.0
      %542 = vmatprep.subr.mxu0 0.0
      %543 = vmatpush1.msra.mxu0 0.0
      %544 = vmatprep.subr.mxu0 0.0
      %545 = vmatpush1.msra.mxu0 0.0
      %546 = vmatprep.subr.mxu0 0.0
      %547 = vmatpush1.msra.mxu0 0.0
      %548 = vmatprep.subr.mxu0 0.0
      %549 = vmatpush1.msra.mxu0 0.0
      %550 = vmatprep.subr.mxu0 0.0
      %551 = vmatpush1.msra.mxu0 0.0
      %552 = vmatprep.subr.mxu0 0.0
      %553 = vmatpush1.msra.mxu0 0.0
      %554 = vmatprep.subr.mxu0 0.0
      %555 = vmatpush1.msra.mxu0 0.0
      %556 = vmatprep.subr.mxu0 0.0
      %557 = vmatpush1.msra.mxu0 0.0
      %558 = vmatprep.subr.mxu0 0.0
      %559 = vmatpush1.msra.mxu0 0.0
      %560 = vmatprep.subr.mxu0 0.0
      %561 = vmatpush1.msra.mxu0 0.0
      %562 = vmatprep.subr.mxu0 0.0
      %563 = vmatpush1.msra.mxu0 0.0
      %564 = vmatprep.mubr.f32.mxu0 0.0
      %565 = vmatmul.mubr.f32.gmra.mrb[0].mxu0 %v477
      %v566 = vpop.f32.mrb[0].mxu0
      %v567 = vadd.f32 %v438, %v566
      %v568 = vpop.f32.mrb[0].mxu0
      %v569 = vadd.f32 %v438, %v568
      %570 = vmatprep.mubr.f32.mxu0 0.0
      %571 = vmatmul.mubr.f32.gmra.mrb[0].mxu0 %v480
      %v572 = vpop.f32.mrb[0].mxu0
      %v573 = vadd.f32 %v443, %v572
      %v574 = vpop.f32.mrb[0].mxu0
      %v575 = vadd.f32 %v443, %v574
      %576 = vmatprep.mubr.f32.mxu0 0.0
      %577 = vmatmul.mubr.f32.gmra.mrb[0].mxu0 %v483
      %v578 = vpop.f32.mrb[0].mxu0
      %v579 = vadd.f32 %v448, %v578
      %v580 = vpop.f32.mrb[0].mxu0
      %v581 = vadd.f32 %v448, %v580
      %582 = vmatprep.mubr.f32.mxu0 0.0
      %583 = vmatmul.mubr.f32.gmra.mrb[0].mxu0 %v486
      %v584 = vpop.f32.mrb[0].mxu0
      %v585 = vadd.f32 %v453, %v584
      %v586 = vpop.f32.mrb[0].mxu0
      %v587 = vadd.f32 %v453, %v586
      %588 = vmatprep.mubr.f32.mxu0 0.0
      %589 = vmatmul.mubr.f32.gmra.mrb[0].mxu0 %v489
      %v590 = vpop.f32.mrb[0].mxu0
      %v591 = vadd.f32 %v458, %v590
      %v592 = vpop.f32.mrb[0].mxu0
      %v593 = vadd.f32 %v458, %v592
      %594 = vmatprep.mubr.f32.mxu0 0.0
      %595 = vmatmul.mubr.f32.gmra.mrb[0].mxu0 %v492
      %v596 = vpop.f32.mrb[0].mxu0
      %v597 = vadd.f32 %v463, %v596
      %v598 = vpop.f32.mrb[0].mxu0
      %v599 = vadd.f32 %v463, %v598
      %600 = vmatprep.mubr.f32.mxu0 0.0
      %601 = vmatmul.mubr.f32.gmra.mrb[0].mxu0 %v495
      %v602 = vpop.f32.mrb[0].mxu0
      %v603 = vadd.f32 %v468, %v602
      %v604 = vpop.f32.mrb[0].mxu0
      %v605 = vadd.f32 %v468, %v604
      %606 = vmatprep.mubr.f32.mxu0 0.0
      %607 = vmatmul.mubr.f32.gmra.mrb[0].mxu0 %v498
      %v608 = vpop.f32.mrb[0].mxu0
      %v609 = vadd.f32 %v473, %v608
      %v610 = vpop.f32.mrb[0].mxu0
      %v611 = vadd.f32 %v473, %v610
      %612 = vdwg.mxu0
      %v613 = vmax.f32 %v567, 0.0
      %v614 = vmax.f32 %v569, 0.0
      %v615 = vmax.f32 %v573, 0.0
      %v616 = vmax.f32 %v575, 0.0
      %v617 = vmax.f32 %v579, 0.0
      %v618 = vmax.f32 %v581, 0.0
      %v619 = vmax.f32 %v585, 0.0
      %v620 = vmax.f32 %v587, 0.0
      %v621 = vmax.f32 %v591, 0.0
      %v622 = vmax.f32 %v593, 0.0
      %v623 = vmax.f32 %v597, 0.0
      %v624 = vmax.f32 %v599, 0.0
      %v625 = vmax.f32 %v603, 0.0
      %v626 = vmax.f32 %v605, 0.0
      %v627 = vmax.f32 %v609, 0.0
      %v628 = vmax.f32 %v611, 0.0
      %v629 = vld [vmem:[%s4] sm:$0x1]
      %v630 = vld [vmem:[#allocation2] sm:$0x1]
      %632 = vset.pattern.permute.xlu0 0
      %633 = vperm.xlu0 %632, %v630
      %v634 = vpop.permute.xlu0 %633
      %v636 = vlaneseq
      %v637 = vshrl.u32 %v636, 7
      %v638 = vsub.s32 0, %v637
      %v639 = vrot.slane %v634, %v638
      %v641 = vsel %vm475, %v629, 0
      %643 = vmatprep.subr.mxu0 %v614
      %644 = vmatpush1.msra.mxu0 %v613
      %645 = vmatprep.subr.mxu0 %v616
      %646 = vmatpush1.msra.mxu0 %v615
      %647 = vmatprep.subr.mxu0 %v618
      %648 = vmatpush1.msra.mxu0 %v617
      %649 = vmatprep.subr.mxu0 %v620
      %650 = vmatpush1.msra.mxu0 %v619
      %651 = vmatprep.subr.mxu0 %v622
      %652 = vmatpush1.msra.mxu0 %v621
      %653 = vmatprep.subr.mxu0 %v624
      %654 = vmatpush1.msra.mxu0 %v623
      %655 = vmatprep.subr.mxu0 %v626
      %656 = vmatpush1.msra.mxu0 %v625
      %657 = vmatprep.subr.mxu0 %v628
      %658 = vmatpush1.msra.mxu0 %v627
      %659 = vmatprep.subr.mxu0 0.0
      %660 = vmatpush1.msra.mxu0 0.0
      %661 = vmatprep.subr.mxu0 0.0
      %662 = vmatpush1.msra.mxu0 0.0
      %663 = vmatprep.subr.mxu0 0.0
      %664 = vmatpush1.msra.mxu0 0.0
      %665 = vmatprep.subr.mxu0 0.0
      %666 = vmatpush1.msra.mxu0 0.0
      %667 = vmatprep.subr.mxu0 0.0
      %668 = vmatpush1.msra.mxu0 0.0
      %669 = vmatprep.subr.mxu0 0.0
      %670 = vmatpush1.msra.mxu0 0.0
      %671 = vmatprep.subr.mxu0 0.0
      %672 = vmatpush1.msra.mxu0 0.0
      %673 = vmatprep.subr.mxu0 0.0
      %674 = vmatpush1.msra.mxu0 0.0
      %675 = vmatprep.subr.mxu0 0.0
      %676 = vmatpush1.msra.mxu0 0.0
      %677 = vmatprep.subr.mxu0 0.0
      %678 = vmatpush1.msra.mxu0 0.0
      %679 = vmatprep.subr.mxu0 0.0
      %680 = vmatpush1.msra.mxu0 0.0
      %681 = vmatprep.subr.mxu0 0.0
      %682 = vmatpush1.msra.mxu0 0.0
      %683 = vmatprep.subr.mxu0 0.0
      %684 = vmatpush1.msra.mxu0 0.0
      %685 = vmatprep.subr.mxu0 0.0
      %686 = vmatpush1.msra.mxu0 0.0
      %687 = vmatprep.subr.mxu0 0.0
      %688 = vmatpush1.msra.mxu0 0.0
      %689 = vmatprep.subr.mxu0 0.0
      %690 = vmatpush1.msra.mxu0 0.0
      %691 = vmatprep.subr.mxu0 0.0
      %692 = vmatpush1.msra.mxu0 0.0
      %693 = vmatprep.subr.mxu0 0.0
      %694 = vmatpush1.msra.mxu0 0.0
      %695 = vmatprep.subr.mxu0 0.0
      %696 = vmatpush1.msra.mxu0 0.0
      %697 = vmatprep.subr.mxu0 0.0
      %698 = vmatpush1.msra.mxu0 0.0
      %699 = vmatprep.subr.mxu0 0.0
      %700 = vmatpush1.msra.mxu0 0.0
      %701 = vmatprep.subr.mxu0 0.0
      %702 = vmatpush1.msra.mxu0 0.0
      %703 = vmatprep.subr.mxu0 0.0
      %704 = vmatpush1.msra.mxu0 0.0
      %705 = vmatprep.subr.mxu0 0.0
      %706 = vmatpush1.msra.mxu0 0.0
      %707 = vmatprep.mubr.f32.mxu0 0.0
      %708 = vmatmul.mubr.f32.gmra.mrb[0].mxu0 %v641
      %v709 = vpop.f32.mrb[0].mxu0
      %v710 = vadd.f32 %v639, %v709
      %v711 = vpop.f32.mrb[0].mxu0
      %v712 = vadd.f32 %v639, %v711
      %713 = vdwg.mxu0
      %v714 = vtanh.pop %v710
      %v715 = vtanh.pop %v712
      %v718 = vcombine.low %v714, %v715
      %v720 = vunpack.c.l.s4 1966171168
      %v721 = vunpack.c.0.s8 %v720
      %v722 = vlaneseq
      %v723 = vshrl.u32 %v722, 7
      %v724 = vsub.s32 %v721, %v723
      %v725 = vrot.slane %v718, %v724
      %v727 = vunpack.c.l.s4 1966171168
      %v728 = vunpack.c.0.s8 %v727
      %v729 = vlaneseq
      %v730 = vshrl.u32 %v729, 7
      %v731 = vsub.s32 %v728, %v730
      %v732 = vrot.slane %v725, %v731
      %v734 = vlaneseq
      %vm735 = vcmp.ge.s32.totalorder %v734, 0
      %vm736 = vcmp.lt.s32.totalorder %v734, 256
      %vm737 = vmand %vm735, %vm736
      %738 = vst.msk [vmem:[%s253] sm:$0x3] %vm737, %v732
      %s739 = smul.u32 2, %s19
      %p740 = scmp.lt.s32.totalorder %s739, 3
      %s741 = scalar_select %p740, %s739, 3
      %s742 = scalar_lea.vmem %s6, %s741
      // Predicated region
      $region45: #{_policy_forward_impl.1} parent=43 // pred_check
        %p743 = pneg %p168
      $region46: #{_policy_forward_impl.1} parent=43 // pred_check_branch
        %745 = sbr.rel (%p743) target = $region48
      $region47: #{_policy_forward_impl.1} parent=43 // pred_region
        %s746 = smul.u32 2, %s19
      $region48: #{_policy_forward_impl.1} parent=43 // pred_fallthru
        _
    $region44: #{_policy_forward_impl.1} parent=5 // pred_fallthru
      _
    %p747 = scmp.le.s32.totalorder 2, %s14
    // Predicated region
    $region49: #{_policy_forward_impl.1} parent=5 // pred_check
      %p748 = pneg %p747
    $region50: #{_policy_forward_impl.1} parent=5 // pred_check_branch
      %750 = sbr.rel (%p748) target = $region52
    $region51: #{_policy_forward_impl.1} parent=5 // pred_region
      %s751 = ssub.s32 %s14, 2
      // Predicated region
      $region53: #{_policy_forward_impl.1} parent=51 // pred_check
        %p752 = pneg %p174
      $region54: #{_policy_forward_impl.1} parent=51 // pred_check_branch
        %754 = sbr.rel (%p752) target = $region56
      $region55: #{_policy_forward_impl.1} parent=51 // pred_region
        %s755 = smul.u32 2, %s20
        %p756 = scmp.lt.s32.totalorder %s755, 3
        %s757 = scalar_select %p756, %s755, 3
        %s758 = scalar_lea.vmem %s6, %s757
      $region56: #{_policy_forward_impl.1} parent=51 // pred_fallthru
        _
    $region52: #{_policy_forward_impl.1} parent=5 // pred_fallthru
      _
  $region6: #{_policy_forward_impl.1} parent=0 // loop_footer
    %s18 = sadd.s32 1, %s14
  $region7: #{_policy_forward_impl.1} parent=0 // loop_footer_branch
    %13 = sbr.rel target = $region3
  $region8: #{_policy_forward_impl.1} parent=0 // loop_exit
    _

</llo_original>
